<compile_context>
chip_gen: v5e
topology: v5e:2x2
jax: 0.10.0
libtpu: 0.0.40
codegen_flags: <defaults>
</compile_context>

<pallas_src>
import functools

import jax
import jax.numpy as jnp
from jax import lax
from jax.experimental import pallas as pl
from jax.experimental.pallas import tpu as pltpu


def _round_up(n, m):
    return ((n + m - 1) // m) * m


def _tile_rows(bs):
    # Batch-tile height: multiple of 8 (sublane), capped at 128.
    return min(128, _round_up(max(int(bs), 1), 8))


def _gather_rows(s_ref, w_ref):
    """W_pad[s, :] for the TB states of this tile via one-hot MXU matmul."""
    tb = s_ref.shape[0]
    sp = w_ref.shape[0]
    onehot = (lax.broadcasted_iota(jnp.int32, (tb, sp), 1)
              == s_ref[...]).astype(jnp.float32)           # [TB, SP]
    return jnp.dot(onehot, w_ref[...],
                   preferred_element_type=jnp.float32)     # [TB, AP]


# ---------------------------------------------------------------------------
# Kernel 1: full Q rows (forward(s)).
# ---------------------------------------------------------------------------
def _q_full_kernel(s_ref, w_ref, q_ref):
    q_ref[...] = _gather_rows(s_ref, w_ref)


# ---------------------------------------------------------------------------
# Kernel 2: per-row scalars (forward(s, a) and greedy(s)); no full-Q store.
# ---------------------------------------------------------------------------
def _q_scalar_kernel(s_ref, a_ref, w_ref, qa_ref, qmax_ref, amax_ref, *, A):
    rows = _gather_rows(s_ref, w_ref)                      # [TB, AP]
    lanes = lax.broadcasted_iota(jnp.int32, rows.shape, 1)

    # Q(s, a): pick lane a[i] per row (masked cross-lane sum -> XLU).
    qa_ref[...] = jnp.sum(jnp.where(lanes == a_ref[...], rows, 0.0),
                          axis=-1, keepdims=True)

    # Greedy stats over the real (unpadded) action lanes only.
    masked = jnp.where(lanes < A, rows, -jnp.inf)
    qmax = jnp.max(masked, axis=-1, keepdims=True)
    qmax_ref[...] = qmax
    # First-occurrence argmax (matches torch.argmax tie-break).
    amax_ref[...] = jnp.min(jnp.where(masked == qmax, lanes, A),
                            axis=-1, keepdims=True)


# ---------------------------------------------------------------------------
# Wrappers.
# ---------------------------------------------------------------------------
@functools.partial(jax.jit, static_argnames=("TB",))
def _q_full_call(s_col, W_pad, *, TB):
    bs_pad = s_col.shape[0]
    SP, AP = W_pad.shape
    grid_spec = pltpu.PrefetchScalarGridSpec(
        num_scalar_prefetch=0,
        grid=(bs_pad // TB,),
        in_specs=[
            pl.BlockSpec((TB, 1), lambda i: (i, 0)),       # state indices
            pl.BlockSpec((SP, AP), lambda i: (0, 0)),      # resident table
        ],
        out_specs=pl.BlockSpec((TB, AP), lambda i: (i, 0)),
    )
    return pl.pallas_call(
        _q_full_kernel,
        grid_spec=grid_spec,
        out_shape=jax.ShapeDtypeStruct((bs_pad, AP), jnp.float32),
        compiler_params=pltpu.CompilerParams(
            dimension_semantics=("parallel",)),
    )(s_col, W_pad)


@functools.partial(jax.jit, static_argnames=("TB", "A"))
def _q_scalar_call(s_col, a_col, W_pad, *, TB, A):
    bs_pad = s_col.shape[0]
    SP, AP = W_pad.shape
    grid_spec = pltpu.PrefetchScalarGridSpec(
        num_scalar_prefetch=0,
        grid=(bs_pad // TB,),
        in_specs=[
            pl.BlockSpec((TB, 1), lambda i: (i, 0)),       # state indices
            pl.BlockSpec((TB, 1), lambda i: (i, 0)),       # action indices
            pl.BlockSpec((SP, AP), lambda i: (0, 0)),      # resident table
        ],
        out_specs=(
            pl.BlockSpec((TB, 1), lambda i: (i, 0)),
            pl.BlockSpec((TB, 1), lambda i: (i, 0)),
            pl.BlockSpec((TB, 1), lambda i: (i, 0)),
        ),
    )
    out_shape = (
        jax.ShapeDtypeStruct((bs_pad, 1), jnp.float32),    # Q(s, a)
        jax.ShapeDtypeStruct((bs_pad, 1), jnp.float32),    # max_a Q(s, .)
        jax.ShapeDtypeStruct((bs_pad, 1), jnp.int32),      # argmax_a Q(s, .)
    )
    return pl.pallas_call(
        functools.partial(_q_scalar_kernel, A=A),
        grid_spec=grid_spec,
        out_shape=out_shape,
        compiler_params=pltpu.CompilerParams(
            dimension_semantics=("parallel",)),
    )(s_col, a_col, W_pad)


class QPallas:
    """Pallas mirror of the torch `Q` module (forward + greedy)."""

    def __init__(self, d_x, S, A, key):
        assert d_x == S, "batch_to_one_hot(s, S) feeds Linear(d_x, A); d_x must equal S"
        self.S = S
        self.A = A
        k_w, k_b = jax.random.split(key)
        # torch nn.Linear default init: U(-1/sqrt(d_x), 1/sqrt(d_x))
        bound = 1.0 / jnp.sqrt(jnp.float32(d_x))
        # Logical params: W [S, A] (transpose of torch's [A, d_x]), b [A].
        self.W = jax.random.uniform(k_w, (d_x, A), jnp.float32, -bound, bound)
        self.b = jax.random.uniform(k_b, (A,), jnp.float32, -bound, bound)
        # Kernel copy: lane-dense last dim (>=128), sublane-aligned rows,
        # bias folded in: W_pad[s, :A] == W[s, :] + b.
        SP = _round_up(S, 8)
        AP = max(128, _round_up(A, 128))
        self.W_pad = (jnp.zeros((SP, AP), jnp.float32)
                      .at[:S, :A].set(self.W + self.b))
        # TODO(synk): for very large S (table beyond ~32 MiB, v7x per-TC VMEM)
        # switch to a manual double-buffered per-row DMA gather instead of a
        # resident table.

    @staticmethod
    def _pad_col(x, bs_pad):
        col = jnp.zeros((bs_pad, 1), jnp.int32)
        return col.at[:x.shape[0], 0].set(x.astype(jnp.int32))

    def forward(self, s, a=None):
        s = jnp.asarray(s, jnp.int32)
        bs = s.shape[0]
        TB = _tile_rows(bs)
        bs_pad = _round_up(bs, TB)
        s_col = self._pad_col(s, bs_pad)
        if a is None:
            q = _q_full_call(s_col, self.W_pad, TB=TB)
            return q[:bs, :self.A]                         # [bs, A]
        a_col = self._pad_col(jnp.asarray(a, jnp.int32), bs_pad)
        qa, _, _ = _q_scalar_call(s_col, a_col, self.W_pad, TB=TB, A=self.A)
        return qa[:bs, 0]                                  # [bs]

    __call__ = forward

    def greedy(self, s, eps=0.0):
        # NOTE: like the torch reference, eps / (A - 1) assumes A > 1 and the
        # pi_s scatter is meaningful for a single state.
        s = jnp.asarray(s, jnp.int32)
        bs = s.shape[0]
        TB = _tile_rows(bs)
        bs_pad = _round_up(bs, TB)
        s_col = self._pad_col(s, bs_pad)
        a_col = jnp.zeros((bs_pad, 1), jnp.int32)
        _, qmax, amax = _q_scalar_call(s_col, a_col, self.W_pad, TB=TB, A=self.A)
        Q_max = qmax[:bs, 0]
        a_max = amax[:bs, 0]
        pi_s = jnp.full((self.A,), eps / (self.A - 1), jnp.float32)
        pi_s = pi_s.at[a_max].set(1.0 - eps)               # matches `pi_s[a_max] = 1 - eps`
        return Q_max, a_max, pi_s


if __name__ == "__main__":
    key = jax.random.PRNGKey(0)
    S, A, d_x, bs = 16, 8, 16, 8

    k_model, k_s, k_a = jax.random.split(key, 3)
    model = QPallas(d_x, S, A, k_model)

    s = jax.random.randint(k_s, (bs,), 0, S, dtype=jnp.int32)
    a = jax.random.randint(k_a, (bs,), 0, A, dtype=jnp.int32)

    Q = jax.block_until_ready(model(s))                    # [bs, A]
    Q_a = jax.block_until_ready(model(s, a))               # [bs]
    Q_max, a_max, pi_s = model.greedy(s[:1], eps=0.1)
    jax.block_until_ready(Q_max)
    Q_sub = jax.block_until_ready(model(s[:5]))            # exercises padding path

    # correctness vs pure-JAX reference (one_hot(s) @ W + b == W[s, :] + b)
    Q_expected = jax.nn.one_hot(s, S, dtype=jnp.float32) @ model.W + model.b
    Qa_expected = Q_expected[jnp.arange(bs), a]
    assert Q.shape == (bs, A) and Q_a.shape == (bs,)
    assert jnp.allclose(Q, Q_expected, atol=1e-5)
    assert jnp.allclose(Q_sub, Q_expected[:5], atol=1e-5)
    assert jnp.allclose(Q_a, Qa_expected, atol=1e-5)
    assert jnp.allclose(Q_max, Q_expected[:1].max(axis=-1), atol=1e-5)
    assert int(a_max[0]) == int(jnp.argmax(Q_expected[0]))
    assert pi_s.shape == (A,)

    print("KERNEL_OK")
</pallas_src>

<mosaic_0001>
module attributes {stable_mosaic.version = 11 : i64} {
  func.func @_q_full_kernel(%arg0: i32, %arg1: memref<8x1xi32, #tpu.memory_space<vmem>>, %arg2: memref<16x128xf32, #tpu.memory_space<vmem>>, %arg3: memref<8x128xf32, #tpu.memory_space<vmem>>) attributes {dimension_semantics = [#tpu.dimension_semantics<parallel>], iteration_bounds = array<i64: 1>, scalar_prefetch = 0 : i64, scratch_operands = 0 : i64, tpu.core_type = #tpu.core_type<tc>, window_params = [{transform_indices = @transform_0, window_bounds = array<i64: 8, 1>}, {pipeline_mode = #tpu.pipeline_mode<synchronous>, transform_indices = @transform_1, window_bounds = array<i64: 16, 128>}, {transform_indices = @transform_2, window_bounds = array<i64: 8, 128>}]} {
    %0 = tpu.iota {dimensions = array<i32: 1>} : vector<8x16xi32>
    %c0 = arith.constant 0 : index
    %c0_0 = arith.constant 0 : index
    %1 = vector.load %arg1[%c0, %c0_0] : memref<8x1xi32, #tpu.memory_space<vmem>>, vector<8x1xi32>
    %2 = vector.broadcast %1 : vector<8x1xi32> to vector<8x16xi32>
    %3 = arith.cmpi eq, %0, %2 : vector<8x16xi32>
    %4 = arith.extui %3 : vector<8x16xi1> to vector<8x16xi32>
    %5 = arith.sitofp %4 : vector<8x16xi32> to vector<8x16xf32>
    %c0_1 = arith.constant 0 : index
    %c0_2 = arith.constant 0 : index
    %6 = vector.load %arg2[%c0_1, %c0_2] : memref<16x128xf32, #tpu.memory_space<vmem>>, vector<16x128xf32>
    %cst = arith.constant dense<0.000000e+00> : vector<8x128xf32>
    %7 = tpu.matmul %5, %6, %cst {dimension_numbers = #tpu.dot_dimension_numbers<[1], [0], [0], [1], [0, 0, 1, 1], [], []>} : vector<8x16xf32>, vector<16x128xf32>, vector<8x128xf32> -> vector<8x128xf32>
    %c0_3 = arith.constant 0 : index
    %c0_4 = arith.constant 0 : index
    %8 = vector.load %arg3[%c0_3, %c0_4] : memref<8x128xf32, #tpu.memory_space<vmem>>, vector<8x128xf32>
    tpu.vector_store %arg3[%c0_3, %c0_4], %7 {strides = array<i32>} : memref<8x128xf32, #tpu.memory_space<vmem>>, vector<8x128xf32>,
    return
  }
  func.func @transform_0(%arg0: i32) -> (i32, i32) {
    %c0_i32 = arith.constant 0 : i32
    %c0_i32_0 = arith.constant 0 : i32
    return %arg0, %c0_i32 : i32, i32
  }
  func.func @transform_1(%arg0: i32) -> (i32, i32) {
    %c0_i32 = arith.constant 0 : i32
    %c0_i32_0 = arith.constant 0 : i32
    %c0_i32_1 = arith.constant 0 : i32
    return %c0_i32, %c0_i32_0 : i32, i32
  }
  func.func @transform_2(%arg0: i32) -> (i32, i32) {
    %c0_i32 = arith.constant 0 : i32
    %c0_i32_0 = arith.constant 0 : i32
    return %arg0, %c0_i32 : i32, i32
  }
}

</mosaic_0001>

<llo_original>
// kernel: _q_full_call.1
$region0: #{_q_full_call.1}
  #allocation0 [shape = 'u32[]', space=smem, size = 0x4, offset = 0x4, fixed_abs, tag = 'smem constant byte address 0x4 - core index']
  #allocation1 [shape = 'u32[72,128]{1,0:T(1,128)}', space=vmem, size = 0x9000, scoped, tag = 'internal scratch']
  %s0 = inlined_call_operand.vmem [shape: s32[8,1], index: 0, kind: input, shape index: {}]
  %s1 = inlined_call_operand.hbm [shape: f32[16,128], index: 1, kind: input, shape index: {}]
  %s2 = inlined_call_operand.hbm [shape: f32[8,128], index: 2, kind: output, shape index: {}]
  %s3 = sld [smem:[#allocation0]]
  $region22: #{_q_full_call.1} parent=0
    _
  %s5 = ssub.s32 1, %s3
  %s6 = scalar_select 0, %s5, %s3
  $region1: #{_q_full_call.1} parent=0
    #allocation2 [shape = 'u8[8192]{0}', space=vmem, size = 0x2000, scoped, tag = 'input window, operand 1, single buffered']
    #allocation3 [shape = 's32[1]{0}', space=sflag, size = 0x4, scoped, tag = 'scoped memory for _q_full_call.1']
    #allocation4 [shape = 's32[1]{0}', space=sflag, size = 0x4, scoped, tag = 'scoped memory for _q_full_call.1']
    #allocation5 [shape = 'u8[4096]{0}', space=vmem, size = 0x1000, scoped, tag = 'output window, operand 0, single buffered']
    %7 = vsyncpa [#allocation3], 0
    %8 = vsyncpa [#allocation4], 0
    // Predicated region
    $region2: #{_q_full_call.1} parent=1 // pred_check
      _
    $region3: #{_q_full_call.1} parent=1 // pred_check_branch
      %10 = sbr.rel (0) target = $region5
    $region4: #{_q_full_call.1} parent=1 // pred_region
      _
    $region5: #{_q_full_call.1} parent=1 // pred_fallthru
      _
    // Predicated region
    $region6: #{_q_full_call.1} parent=1 // pred_check
      _
    $region7: #{_q_full_call.1} parent=1 // pred_check_branch
      %12 = sbr.rel (0) target = $region9
    $region8: #{_q_full_call.1} parent=1 // pred_region
      %14 = vsyncadd [#allocation3], 0
      %s15 = sshll.u32 %s1, 4
      %s16 = int_to_ptr.hbm [resolvable:$true] %s15
      %s17 = sshll.u32 [#allocation2], 4
      %s18 = int_to_ptr.vmem [resolvable:$true] %s17
      %23 = dma.hbm_to_vmem [thread:$0]  %s16, 256, %s18, [#allocation3], 128, 128, 8
    $region9: #{_q_full_call.1} parent=1 // pred_fallthru
      _
    // Predicated region
    $region10: #{_q_full_call.1} parent=1 // pred_check
      _
    $region11: #{_q_full_call.1} parent=1 // pred_check_branch
      %25 = sbr.rel (0) target = $region13
    $region12: #{_q_full_call.1} parent=1 // pred_region
      %27 = dma.done [#allocation3], 256
    $region13: #{_q_full_call.1} parent=1 // pred_fallthru
      _
    %v28 = vlaneseq
    %v29 = vand.u32 %v28, 127
    %v30 = vld [vmem:[%s0] sm:$0xff]
    %31 = vset.pattern.permute.xlu0 0
    %32 = vperm.xlu0 %31, %v30
    %v33 = vpop.permute.xlu0 %32
    %vm34 = vcmp.eq.s32.totalorder %v29, %v33
    %v35 = vsel %vm34, 1, 0
    %v36 = vcvt.s32.f32 %v35
    %v37 = vld [vmem:[#allocation2] sm:$0xff]
    %v38 = vld [vmem:[#allocation2 + $0x8] sm:$0xff]
    %vm39 = vcmask 130048
    %v41 = vsel %vm39, %v36, 0
    %43 = vmatpush.msra.mxu0 0.0
    %44 = vmatpush.msra.mxu0 0.0
    %45 = vmatpush.msra.mxu0 0.0
    %46 = vmatpush.msra.mxu0 0.0
    %47 = vmatpush.msra.mxu0 0.0
    %48 = vmatpush.msra.mxu0 0.0
    %49 = vmatpush.msra.mxu0 0.0
    %50 = vmatpush.msra.mxu0 0.0
    %51 = vmatpush.msra.mxu0 0.0
    %52 = vmatpush.msra.mxu0 0.0
    %53 = vmatpush.msra.mxu0 0.0
    %54 = vmatpush.msra.mxu0 0.0
    %55 = vmatpush.msra.mxu0 0.0
    %56 = vmatpush.msra.mxu0 0.0
    %57 = vmatpush.msra.mxu0 %v38
    %58 = vmatpush.msra.mxu0 %v37
    %59 = vmatmul.f32.gmra.mxu0 %v41
    %v60 = vpop.f32.mrf.mxu0
    %v61 = vadd.f32 0.0, %v60
    %62 = vdwg.mxu0
    %63 = vst [vmem:[#allocation5] sm:$0xff] %v61
    // Predicated region
    $region14: #{_q_full_call.1} parent=1 // pred_check
      _
    $region15: #{_q_full_call.1} parent=1 // pred_check_branch
      %65 = sbr.rel (0) target = $region17
    $region16: #{_q_full_call.1} parent=1 // pred_region
      %67 = vsyncadd [#allocation4], 0
      %s69 = sshll.u32 [#allocation5], 4
      %s70 = int_to_ptr.vmem [resolvable:$true] %s69
      %s71 = sshll.u32 %s2, 4
      %s72 = int_to_ptr.hbm [resolvable:$true] %s71
      %74 = dma.vmem_to_hbm [thread:$0]  %s70, 128, %s72, [#allocation4]
    $region17: #{_q_full_call.1} parent=1 // pred_fallthru
      _
    // Predicated region
    $region18: #{_q_full_call.1} parent=1 // pred_check
      _
    $region19: #{_q_full_call.1} parent=1 // pred_check_branch
      %76 = sbr.rel (0) target = $region21
    $region20: #{_q_full_call.1} parent=1 // pred_region
      %78 = dma.done [#allocation4], 128
    $region21: #{_q_full_call.1} parent=1 // pred_fallthru
      _
    %79 = vsyncpa [#allocation3], 1
    %80 = vsyncpa [#allocation4], 1

</llo_original>
